<compile_context>
chip_gen: v7x
topology: tpu7x:2x2x1
jax: 0.10.0
libtpu: 0.0.40
codegen_flags: <defaults>
</compile_context>

<pallas_src>
import functools

import jax
import jax.numpy as jnp
from jax.experimental import pallas as pl
from jax.experimental.pallas import tpu as pltpu

HIDDEN_SIZE = 128
NUM_CLASSES = 3
NUM_LAYERS = 2
C_PAD = 8            # classes padded to one sublane group (3 -> 8)


def _pick_gate_dtype():
    """bf16 gate math only on chips with a bf16 VPU/EUP (v6e / v7x)."""
    try:
        kind = jax.devices()[0].device_kind.lower()
    except Exception:
        return jnp.float32
    if ("v6" in kind) or ("v7" in kind) or ("7x" in kind):
        return jnp.bfloat16
    return jnp.float32


def _sigmoid_1push(x):
    # sigmoid(x) = 0.5 * (1 + tanh(x/2)): exactly one EUP push per element.
    return 0.5 * jnp.tanh(0.5 * x) + 0.5


def _lstm_fc_kernel(x_ref, wih0_ref, b0_ref, wih1_ref, b1_ref,
                    wfc_ref, bfc_ref, out_ref, *, gate_dtype):
    H = HIDDEN_SIZE

    def cell(inp_bf16, w_ref, b_ref):
        # bf16 x bf16 on the MXU, f32 accumulation; gate math in gate_dtype.
        g = (jnp.dot(inp_bf16, w_ref[...], preferred_element_type=jnp.float32)
             + b_ref[...]).astype(gate_dtype)                 # (TB, 3H)
        i = _sigmoid_1push(g[:, 0:H])
        c = jnp.tanh(g[:, H:2 * H])
        o = _sigmoid_1push(g[:, 2 * H:3 * H])
        return (o * jnp.tanh(i * c)).astype(jnp.bfloat16)     # (TB, H)

    # Layer 0 (single step, h_prev = c_prev = 0; forget gate dropped).
    h0 = cell(x_ref[...].astype(jnp.bfloat16), wih0_ref, b0_ref)
    # Layer 1 (input = h0).
    h1 = cell(h0, wih1_ref, b1_ref)

    # Final FC, transposed: (C_PAD, H) @ (H, TB) -> (C_PAD, TB).  Classes sit
    # on sublanes, batch on lanes -> tiny output store (32 B / batch row).
    out_t = jnp.dot(wfc_ref[...], h1.T,
                    preferred_element_type=jnp.float32) + bfc_ref[...]
    out_ref[0] = out_t


def lstm_forward(x, params, *, gate_dtype=None):
    """x: (B, input_size) float32 -> (B, NUM_CLASSES) float32."""
    if gate_dtype is None:
        gate_dtype = _pick_gate_dtype()
    wih0_t, b0, wih1_t, b1, wfc_c, bfc = params
    B, D_in = x.shape
    H = HIDDEN_SIZE

    # Adaptive batch tile: multiple of 8 (f32 sublanes), >= 2 grid steps when
    # B > 8 (v7x megacore), capped at 64 to bound live f32 gate intermediates.
    TB = min(64, max(8, ((((B + 1) // 2) + 7) // 8) * 8))
    nblk = pl.cdiv(B, TB)     # ragged last block handled by Pallas masking

    cost = pl.CostEstimate(
        flops=2 * B * (D_in * 3 * H + H * 3 * H + H * C_PAD),
        transcendentals=8 * B * H,
        bytes_accessed=(x.size * 4
                        + (wih0_t.size + wih1_t.size + wfc_c.size) * 2
                        + (b0.size + b1.size + bfc.size) * 4
                        + nblk * C_PAD * TB * 4),
    )

    out_t = pl.pallas_call(
        functools.partial(_lstm_fc_kernel, gate_dtype=gate_dtype),
        out_shape=jax.ShapeDtypeStruct((nblk, C_PAD, TB), jnp.float32),
        grid=(nblk,),
        in_specs=[
            pl.BlockSpec((TB, D_in), lambda i: (i, 0)),        # x block (f32)
            pl.BlockSpec((D_in, 3 * H), lambda i: (0, 0)),     # W_ih layer 0 (i,g,o)
            pl.BlockSpec((1, 3 * H), lambda i: (0, 0)),        # bias layer 0
            pl.BlockSpec((H, 3 * H), lambda i: (0, 0)),        # W_ih layer 1 (i,g,o)
            pl.BlockSpec((1, 3 * H), lambda i: (0, 0)),        # bias layer 1
            pl.BlockSpec((C_PAD, H), lambda i: (0, 0)),        # fc weight (padded rows)
            pl.BlockSpec((C_PAD, 1), lambda i: (0, 0)),        # fc bias (padded)
        ],
        out_specs=pl.BlockSpec((1, C_PAD, TB), lambda i: (i, 0, 0)),
        compiler_params=pltpu.CompilerParams(
            dimension_semantics=("parallel",)),
        cost_estimate=cost,
    )(x, wih0_t, b0, wih1_t, b1, wfc_c, bfc)

    # (nblk, C_PAD, TB) -> (nblk*TB, C_PAD) -> (B, NUM_CLASSES).  Tiny op.
    out = jnp.transpose(out_t, (0, 2, 1)).reshape(nblk * TB, C_PAD)
    return out[:B, :NUM_CLASSES]


def make_params(key, input_size):
    """PyTorch-style U(-1/sqrt(H), 1/sqrt(H)) init, then kernel-ready packing:
    drop the dead forget gate, fold b_ih + b_hh, transpose, cast weights to
    bf16, pad the fc weight/bias from 3 to 8 classes (one sublane group)."""
    H, C = HIDDEN_SIZE, NUM_CLASSES
    k = 1.0 / jnp.sqrt(jnp.float32(H))
    keys = jax.random.split(key, 8)

    def u(kk, shape):
        return jax.random.uniform(kk, shape, jnp.float32, -k, k)

    # Layer 0 (W_hh unused since h_prev = 0; only its bias survives).
    w_ih0 = u(keys[0], (4 * H, input_size))
    b_ih0 = u(keys[1], (4 * H,))
    b_hh0 = u(keys[2], (4 * H,))
    # Layer 1.
    w_ih1 = u(keys[3], (4 * H, H))
    b_ih1 = u(keys[4], (4 * H,))
    b_hh1 = u(keys[5], (4 * H,))
    # FC.
    w_fc = u(keys[6], (C, H))
    b_fc = u(keys[7], (C,))

    def igo_rows(a):  # keep (i, g, o) rows, drop the dead forget gate
        return jnp.concatenate([a[0:H], a[2 * H:3 * H], a[3 * H:4 * H]], axis=0)

    wih0_t = jnp.transpose(igo_rows(w_ih0)).astype(jnp.bfloat16)   # (D_in, 3H)
    b0 = igo_rows(b_ih0 + b_hh0).reshape(1, 3 * H)                 # f32
    wih1_t = jnp.transpose(igo_rows(w_ih1)).astype(jnp.bfloat16)   # (H, 3H)
    b1 = igo_rows(b_ih1 + b_hh1).reshape(1, 3 * H)                 # f32
    wfc_c = (jnp.zeros((C_PAD, H), jnp.float32)
             .at[:C, :].set(w_fc)).astype(jnp.bfloat16)            # (8, H)
    bfc = jnp.zeros((C_PAD, 1), jnp.float32).at[:C, 0].set(b_fc)   # (8, 1)
    return (wih0_t, b0, wih1_t, b1, wfc_c, bfc)


def _reference(x, params, gate_dtype):
    """Pure-JAX reference of the same forward (same bf16/f32 dtype path)."""
    H = HIDDEN_SIZE
    wih0_t, b0, wih1_t, b1, wfc_c, bfc = params

    def cell(inp_bf16, w_t, b):
        g = (jnp.dot(inp_bf16, w_t, preferred_element_type=jnp.float32)
             + b).astype(gate_dtype)
        i = _sigmoid_1push(g[:, 0:H])
        c = jnp.tanh(g[:, H:2 * H])
        o = _sigmoid_1push(g[:, 2 * H:3 * H])
        return (o * jnp.tanh(i * c)).astype(jnp.bfloat16)

    h0 = cell(x.astype(jnp.bfloat16), wih0_t, b0)
    h1 = cell(h0, wih1_t, b1)
    out_t = jnp.dot(wfc_c, h1.T, preferred_element_type=jnp.float32) + bfc
    return jnp.transpose(out_t)[:, :NUM_CLASSES]


if __name__ == "__main__":
    batch = 8
    input_size = 16

    key = jax.random.PRNGKey(0)
    kx, kp = jax.random.split(key)
    x = jax.random.normal(kx, (batch, input_size), jnp.float32)
    params = make_params(kp, input_size)
    gate_dtype = _pick_gate_dtype()

    out = jax.block_until_ready(lstm_forward(x, params, gate_dtype=gate_dtype))
    ref = _reference(x, params, gate_dtype)

    assert out.shape == (batch, NUM_CLASSES)
    tol = 2e-2 if gate_dtype == jnp.bfloat16 else 1e-3
    assert jnp.allclose(out, ref, atol=tol, rtol=tol), (
        f"max abs diff = {jnp.max(jnp.abs(out - ref))}")
    print("KERNEL_OK")
</pallas_src>

<mosaic_0001>
module attributes {stable_mosaic.version = 11 : i64} {
  func.func @_lstm_fc_kernel(%arg0: i32, %arg1: memref<8x16xf32, #tpu.memory_space<vmem>>, %arg2: memref<16x384xbf16, #tpu.memory_space<vmem>>, %arg3: memref<1x384xf32, #tpu.memory_space<vmem>>, %arg4: memref<128x384xbf16, #tpu.memory_space<vmem>>, %arg5: memref<1x384xf32, #tpu.memory_space<vmem>>, %arg6: memref<8x128xbf16, #tpu.memory_space<vmem>>, %arg7: memref<8x1xf32, #tpu.memory_space<vmem>>, %arg8: memref<1x8x8xf32, #tpu.memory_space<vmem>>) attributes {dimension_semantics = [#tpu.dimension_semantics<parallel>], iteration_bounds = array<i64: 1>, scalar_prefetch = 0 : i64, scratch_operands = 0 : i64, tpu.core_type = #tpu.core_type<tc>, window_params = [{transform_indices = @transform_0, window_bounds = array<i64: 8, 16>}, {pipeline_mode = #tpu.pipeline_mode<synchronous>, transform_indices = @transform_1, window_bounds = array<i64: 16, 384>}, {pipeline_mode = #tpu.pipeline_mode<synchronous>, transform_indices = @transform_2, window_bounds = array<i64: 1, 384>}, {pipeline_mode = #tpu.pipeline_mode<synchronous>, transform_indices = @transform_3, window_bounds = array<i64: 128, 384>}, {pipeline_mode = #tpu.pipeline_mode<synchronous>, transform_indices = @transform_4, window_bounds = array<i64: 1, 384>}, {pipeline_mode = #tpu.pipeline_mode<synchronous>, transform_indices = @transform_5, window_bounds = array<i64: 8, 128>}, {pipeline_mode = #tpu.pipeline_mode<synchronous>, transform_indices = @transform_6, window_bounds = array<i64: 8, 1>}, {transform_indices = @transform_7, window_bounds = array<i64: 1, 8, 8>}]} {
    %c0 = arith.constant 0 : index
    %c0_0 = arith.constant 0 : index
    %0 = vector.load %arg1[%c0, %c0_0] : memref<8x16xf32, #tpu.memory_space<vmem>>, vector<8x16xf32>
    %1 = arith.truncf %0 : vector<8x16xf32> to vector<8x16xbf16>
    %c0_1 = arith.constant 0 : index
    %c0_2 = arith.constant 0 : index
    %2 = vector.load %arg2[%c0_1, %c0_2] : memref<16x384xbf16, #tpu.memory_space<vmem>>, vector<16x384xbf16>
    %cst = arith.constant dense<0.000000e+00> : vector<8x384xf32>
    %3 = tpu.matmul %1, %2, %cst {dimension_numbers = #tpu.dot_dimension_numbers<[1], [0], [0], [1], [0, 0, 1, 1], [], []>} : vector<8x16xbf16>, vector<16x384xbf16>, vector<8x384xf32> -> vector<8x384xf32>
    %c0_3 = arith.constant 0 : index
    %c0_4 = arith.constant 0 : index
    %4 = vector.load %arg3[%c0_3, %c0_4] : memref<1x384xf32, #tpu.memory_space<vmem>>, vector<1x384xf32>
    %5 = vector.broadcast %4 : vector<1x384xf32> to vector<8x384xf32>
    %6 = arith.addf %3, %5 : vector<8x384xf32>
    %7 = vector.extract_strided_slice %6 {offsets = [0, 0], sizes = [8, 128], strides = [1, 1]} : vector<8x384xf32> to vector<8x128xf32>
    %cst_5 = arith.constant 5.000000e-01 : f32
    %8 = vector.broadcast %cst_5 : f32 to vector<8x128xf32>
    %9 = arith.mulf %8, %7 : vector<8x128xf32>
    %10 = math.tanh %9 : vector<8x128xf32>
    %cst_6 = arith.constant 5.000000e-01 : f32
    %11 = vector.broadcast %cst_6 : f32 to vector<8x128xf32>
    %12 = arith.mulf %11, %10 : vector<8x128xf32>
    %cst_7 = arith.constant 5.000000e-01 : f32
    %13 = vector.broadcast %cst_7 : f32 to vector<8x128xf32>
    %14 = arith.addf %12, %13 : vector<8x128xf32>
    %15 = vector.extract_strided_slice %6 {offsets = [0, 128], sizes = [8, 128], strides = [1, 1]} : vector<8x384xf32> to vector<8x128xf32>
    %16 = math.tanh %15 : vector<8x128xf32>
    %17 = vector.extract_strided_slice %6 {offsets = [0, 256], sizes = [8, 128], strides = [1, 1]} : vector<8x384xf32> to vector<8x128xf32>
    %cst_8 = arith.constant 5.000000e-01 : f32
    %18 = vector.broadcast %cst_8 : f32 to vector<8x128xf32>
    %19 = arith.mulf %18, %17 : vector<8x128xf32>
    %20 = math.tanh %19 : vector<8x128xf32>
    %cst_9 = arith.constant 5.000000e-01 : f32
    %21 = vector.broadcast %cst_9 : f32 to vector<8x128xf32>
    %22 = arith.mulf %21, %20 : vector<8x128xf32>
    %cst_10 = arith.constant 5.000000e-01 : f32
    %23 = vector.broadcast %cst_10 : f32 to vector<8x128xf32>
    %24 = arith.addf %22, %23 : vector<8x128xf32>
    %25 = arith.mulf %14, %16 : vector<8x128xf32>
    %26 = math.tanh %25 : vector<8x128xf32>
    %27 = arith.mulf %24, %26 : vector<8x128xf32>
    %28 = arith.truncf %27 : vector<8x128xf32> to vector<8x128xbf16>
    %c0_11 = arith.constant 0 : index
    %c0_12 = arith.constant 0 : index
    %29 = vector.load %arg4[%c0_11, %c0_12] : memref<128x384xbf16, #tpu.memory_space<vmem>>, vector<128x384xbf16>
    %cst_13 = arith.constant dense<0.000000e+00> : vector<8x384xf32>
    %30 = tpu.matmul %28, %29, %cst_13 {dimension_numbers = #tpu.dot_dimension_numbers<[1], [0], [0], [1], [0, 0, 1, 1], [], []>} : vector<8x128xbf16>, vector<128x384xbf16>, vector<8x384xf32> -> vector<8x384xf32>
    %c0_14 = arith.constant 0 : index
    %c0_15 = arith.constant 0 : index
    %31 = vector.load %arg5[%c0_14, %c0_15] : memref<1x384xf32, #tpu.memory_space<vmem>>, vector<1x384xf32>
    %32 = vector.broadcast %31 : vector<1x384xf32> to vector<8x384xf32>
    %33 = arith.addf %30, %32 : vector<8x384xf32>
    %34 = vector.extract_strided_slice %33 {offsets = [0, 0], sizes = [8, 128], strides = [1, 1]} : vector<8x384xf32> to vector<8x128xf32>
    %cst_16 = arith.constant 5.000000e-01 : f32
    %35 = vector.broadcast %cst_16 : f32 to vector<8x128xf32>
    %36 = arith.mulf %35, %34 : vector<8x128xf32>
    %37 = math.tanh %36 : vector<8x128xf32>
    %cst_17 = arith.constant 5.000000e-01 : f32
    %38 = vector.broadcast %cst_17 : f32 to vector<8x128xf32>
    %39 = arith.mulf %38, %37 : vector<8x128xf32>
    %cst_18 = arith.constant 5.000000e-01 : f32
    %40 = vector.broadcast %cst_18 : f32 to vector<8x128xf32>
    %41 = arith.addf %39, %40 : vector<8x128xf32>
    %42 = vector.extract_strided_slice %33 {offsets = [0, 128], sizes = [8, 128], strides = [1, 1]} : vector<8x384xf32> to vector<8x128xf32>
    %43 = math.tanh %42 : vector<8x128xf32>
    %44 = vector.extract_strided_slice %33 {offsets = [0, 256], sizes = [8, 128], strides = [1, 1]} : vector<8x384xf32> to vector<8x128xf32>
    %cst_19 = arith.constant 5.000000e-01 : f32
    %45 = vector.broadcast %cst_19 : f32 to vector<8x128xf32>
    %46 = arith.mulf %45, %44 : vector<8x128xf32>
    %47 = math.tanh %46 : vector<8x128xf32>
    %cst_20 = arith.constant 5.000000e-01 : f32
    %48 = vector.broadcast %cst_20 : f32 to vector<8x128xf32>
    %49 = arith.mulf %48, %47 : vector<8x128xf32>
    %cst_21 = arith.constant 5.000000e-01 : f32
    %50 = vector.broadcast %cst_21 : f32 to vector<8x128xf32>
    %51 = arith.addf %49, %50 : vector<8x128xf32>
    %52 = arith.mulf %41, %43 : vector<8x128xf32>
    %53 = math.tanh %52 : vector<8x128xf32>
    %54 = arith.mulf %51, %53 : vector<8x128xf32>
    %55 = arith.truncf %54 : vector<8x128xf32> to vector<8x128xbf16>
    %c0_22 = arith.constant 0 : index
    %c0_23 = arith.constant 0 : index
    %56 = vector.load %arg6[%c0_22, %c0_23] : memref<8x128xbf16, #tpu.memory_space<vmem>>, vector<8x128xbf16>
    %57 = tpu.transpose %55, [1, 0] : vector<8x128xbf16> -> vector<128x8xbf16>
    %cst_24 = arith.constant dense<0.000000e+00> : vector<8x8xf32>
    %58 = tpu.matmul %56, %57, %cst_24 {dimension_numbers = #tpu.dot_dimension_numbers<[1], [0], [0], [1], [0, 0, 1, 1], [], []>} : vector<8x128xbf16>, vector<128x8xbf16>, vector<8x8xf32> -> vector<8x8xf32>
    %c0_25 = arith.constant 0 : index
    %c0_26 = arith.constant 0 : index
    %59 = vector.load %arg7[%c0_25, %c0_26] : memref<8x1xf32, #tpu.memory_space<vmem>>, vector<8x1xf32>
    %60 = vector.broadcast %59 : vector<8x1xf32> to vector<8x8xf32>
    %61 = arith.addf %58, %60 : vector<8x8xf32>
    %c0_27 = arith.constant 0 : index
    %c0_28 = arith.constant 0 : index
    %c0_29 = arith.constant 0 : index
    %62 = vector.load %arg8[%c0_27, %c0_28, %c0_29] : memref<1x8x8xf32, #tpu.memory_space<vmem>>, vector<1x8x8xf32>
    %63 = vector.shape_cast %62 : vector<1x8x8xf32> to vector<8x8xf32>
    %64 = vector.shape_cast %61 : vector<8x8xf32> to vector<1x8x8xf32>
    tpu.vector_store %arg8[%c0_27, %c0_28, %c0_29], %64 {strides = array<i32>} : memref<1x8x8xf32, #tpu.memory_space<vmem>>, vector<1x8x8xf32>,
    return
  }
  func.func @transform_0(%arg0: i32) -> (i32, i32) {
    %c0_i32 = arith.constant 0 : i32
    %c0_i32_0 = arith.constant 0 : i32
    return %arg0, %c0_i32 : i32, i32
  }
  func.func @transform_1(%arg0: i32) -> (i32, i32) {
    %c0_i32 = arith.constant 0 : i32
    %c0_i32_0 = arith.constant 0 : i32
    %c0_i32_1 = arith.constant 0 : i32
    return %c0_i32, %c0_i32_0 : i32, i32
  }
  func.func @transform_2(%arg0: i32) -> (i32, i32) {
    %c0_i32 = arith.constant 0 : i32
    %c0_i32_0 = arith.constant 0 : i32
    %c0_i32_1 = arith.constant 0 : i32
    return %c0_i32, %c0_i32_0 : i32, i32
  }
  func.func @transform_3(%arg0: i32) -> (i32, i32) {
    %c0_i32 = arith.constant 0 : i32
    %c0_i32_0 = arith.constant 0 : i32
    %c0_i32_1 = arith.constant 0 : i32
    return %c0_i32, %c0_i32_0 : i32, i32
  }
  func.func @transform_4(%arg0: i32) -> (i32, i32) {
    %c0_i32 = arith.constant 0 : i32
    %c0_i32_0 = arith.constant 0 : i32
    %c0_i32_1 = arith.constant 0 : i32
    return %c0_i32, %c0_i32_0 : i32, i32
  }
  func.func @transform_5(%arg0: i32) -> (i32, i32) {
    %c0_i32 = arith.constant 0 : i32
    %c0_i32_0 = arith.constant 0 : i32
    %c0_i32_1 = arith.constant 0 : i32
    return %c0_i32, %c0_i32_0 : i32, i32
  }
  func.func @transform_6(%arg0: i32) -> (i32, i32) {
    %c0_i32 = arith.constant 0 : i32
    %c0_i32_0 = arith.constant 0 : i32
    %c0_i32_1 = arith.constant 0 : i32
    return %c0_i32, %c0_i32_0 : i32, i32
  }
  func.func @transform_7(%arg0: i32) -> (i32, i32, i32) {
    %c0_i32 = arith.constant 0 : i32
    %c0_i32_0 = arith.constant 0 : i32
    %c0_i32_1 = arith.constant 0 : i32
    return %arg0, %c0_i32, %c0_i32_0 : i32, i32, i32
  }
}

</mosaic_0001>

<llo_original>
// kernel: tpu_custom_call.1
$region0: #{tpu_custom_call.1}
  #allocation0 [shape = 'u32[]', space=smem, size = 0x4, offset = 0x4, fixed_abs, tag = 'smem constant byte address 0x4 - core index']
  #allocation1 [shape = 'u32[144,128]{1,0:T(1,128)}', space=vmem, size = 0x12000, scoped, tag = 'internal scratch']
  %s0 = inlined_call_operand.vmem [shape: f32[8,16], index: 0, kind: input, shape index: {}]
  %s1 = inlined_call_operand.hbm [shape: bf16[16,384], index: 1, kind: input, shape index: {}]
  %s2 = inlined_call_operand.vmem [shape: f32[1,384], index: 2, kind: input, shape index: {}]
  %s3 = inlined_call_operand.hbm [shape: bf16[128,384], index: 3, kind: input, shape index: {}]
  %s4 = inlined_call_operand.vmem [shape: f32[1,384], index: 4, kind: input, shape index: {}]
  %s5 = inlined_call_operand.vmem [shape: bf16[8,128], index: 5, kind: input, shape index: {}]
  %s6 = inlined_call_operand.vmem [shape: f32[8,1], index: 6, kind: input, shape index: {}]
  %s7 = inlined_call_operand.hbm [shape: f32[1,8,8], index: 7, kind: output, shape index: {}]
  %s8 = sld [smem:[#allocation0]]
  $region46: #{tpu_custom_call.1} parent=0
    _
  %s10 = ssub.s32 1, %s8
  %s11 = scalar_select 0, %s10, %s8
  $region1: #{tpu_custom_call.1} parent=0
    #allocation2 [shape = 'u8[12288]{0}', space=vmem, size = 0x3000, scoped, tag = 'input window, operand 1, single buffered']
    #allocation3 [shape = 's32[1]{0}', space=sflag, size = 0x4, scoped, tag = 'scoped memory for tpu_custom_call.1']
    #allocation4 [shape = 's32[1]{0}', space=sflag, size = 0x4, scoped, tag = 'scoped memory for tpu_custom_call.1']
    #allocation5 [shape = 'u8[98304]{0}', space=vmem, size = 0x18000, scoped, tag = 'input window, operand 3, single buffered']
    #allocation6 [shape = 's32[1]{0}', space=sflag, size = 0x4, scoped, tag = 'scoped memory for tpu_custom_call.1']
    #allocation7 [shape = 'u8[4096]{0}', space=vmem, size = 0x1000, scoped, tag = 'output window, operand 0, single buffered']
    %12 = vsyncpa [#allocation3], 0
    %13 = vsyncpa [#allocation6], 0
    %14 = vsyncpa [#allocation4], 0
    // Predicated region
    $region2: #{tpu_custom_call.1} parent=1 // pred_check
      _
    $region3: #{tpu_custom_call.1} parent=1 // pred_check_branch
      %16 = sbr.rel (0) target = $region5
    $region4: #{tpu_custom_call.1} parent=1 // pred_region
      _
    $region5: #{tpu_custom_call.1} parent=1 // pred_fallthru
      _
    // Predicated region
    $region6: #{tpu_custom_call.1} parent=1 // pred_check
      _
    $region7: #{tpu_custom_call.1} parent=1 // pred_check_branch
      %18 = sbr.rel (0) target = $region9
    $region8: #{tpu_custom_call.1} parent=1 // pred_region
      %s20 = ssub.s32 384, 384
      %21 = vsyncadd [#allocation3], %s20
      %s22 = sshll.u32 [#allocation2], 4
      %s23 = int_to_ptr.vmem [resolvable:$true] %s22
      %28 = dma.hbm_to_vmem [thread:$0]  %s1, 384, %s23, [#allocation3], 192, 192, 12
    $region9: #{tpu_custom_call.1} parent=1 // pred_fallthru
      _
    // Predicated region
    $region10: #{tpu_custom_call.1} parent=1 // pred_check
      _
    $region11: #{tpu_custom_call.1} parent=1 // pred_check_branch
      %30 = sbr.rel (0) target = $region13
    $region12: #{tpu_custom_call.1} parent=1 // pred_region
      _
    $region13: #{tpu_custom_call.1} parent=1 // pred_fallthru
      _
    // Predicated region
    $region14: #{tpu_custom_call.1} parent=1 // pred_check
      _
    $region15: #{tpu_custom_call.1} parent=1 // pred_check_branch
      %32 = sbr.rel (0) target = $region17
    $region16: #{tpu_custom_call.1} parent=1 // pred_region
      %s34 = ssub.s32 3072, 3072
      %35 = vsyncadd [#allocation6], %s34
      %s36 = sshll.u32 [#allocation5], 4
      %s37 = int_to_ptr.vmem [resolvable:$true] %s36
      %42 = dma.hbm_to_vmem [thread:$0]  %s3, 3072, %s37, [#allocation6], 192, 192, 12
    $region17: #{tpu_custom_call.1} parent=1 // pred_fallthru
      _
    // Predicated region
    $region18: #{tpu_custom_call.1} parent=1 // pred_check
      _
    $region19: #{tpu_custom_call.1} parent=1 // pred_check_branch
      %44 = sbr.rel (0) target = $region21
    $region20: #{tpu_custom_call.1} parent=1 // pred_region
      _
    $region21: #{tpu_custom_call.1} parent=1 // pred_fallthru
      _
    // Predicated region
    $region22: #{tpu_custom_call.1} parent=1 // pred_check
      _
    $region23: #{tpu_custom_call.1} parent=1 // pred_check_branch
      %46 = sbr.rel (0) target = $region25
    $region24: #{tpu_custom_call.1} parent=1 // pred_region
      _
    $region25: #{tpu_custom_call.1} parent=1 // pred_fallthru
      _
    // Predicated region
    $region26: #{tpu_custom_call.1} parent=1 // pred_check
      _
    $region27: #{tpu_custom_call.1} parent=1 // pred_check_branch
      %48 = sbr.rel (0) target = $region29
    $region28: #{tpu_custom_call.1} parent=1 // pred_region
      _
    $region29: #{tpu_custom_call.1} parent=1 // pred_fallthru
      _
    // Predicated region
    $region30: #{tpu_custom_call.1} parent=1 // pred_check
      _
    $region31: #{tpu_custom_call.1} parent=1 // pred_check_branch
      %50 = sbr.rel (0) target = $region33
    $region32: #{tpu_custom_call.1} parent=1 // pred_region
      %51 = dma.done [#allocation3], 384
    $region33: #{tpu_custom_call.1} parent=1 // pred_fallthru
      _
    // Predicated region
    $region34: #{tpu_custom_call.1} parent=1 // pred_check
      _
    $region35: #{tpu_custom_call.1} parent=1 // pred_check_branch
      %53 = sbr.rel (0) target = $region37
    $region36: #{tpu_custom_call.1} parent=1 // pred_region
      %54 = dma.done [#allocation6], 3072
    $region37: #{tpu_custom_call.1} parent=1 // pred_fallthru
      _
    %v56 = vld [vmem:[%s0] sm:$0xff]
    %v57 = vpack.c.bf16 %v56, %v56
    %v58 = vld [vmem:[#allocation2] sm:$0xff]
    %v59 = vld [vmem:[#allocation2 + $0x8] sm:$0xf]
    %v60 = vld [vmem:[#allocation2 + $0xc] sm:$0xff]
    %v61 = vld [vmem:[#allocation2 + $0x14] sm:$0xf]
    %v62 = vld [vmem:[%s2] sm:$0x7]
    %v64 = vlaneseq
    %v65 = vshrl.u32 %v64, 7
    %v66 = vsub.s32 0, %v65
    %v67 = vrot.slane %v62, %v66
    %v68 = vlaneseq
    %v69 = vshrl.u32 %v68, 7
    %v70 = vsub.s32 1, %v69
    %v71 = vrot.slane %v62, %v70
    %v72 = vlaneseq
    %v73 = vshrl.u32 %v72, 7
    %v74 = vsub.s32 2, %v73
    %v75 = vrot.slane %v62, %v74
    %v83 = vunpack.c.l.b16 %v58
    %v84 = vunpack.c.h.b16 %v58
    %v85 = vunpack.c.l.b16 %v59
    %v86 = vunpack.c.l.b16 %v60
    %v87 = vunpack.c.h.b16 %v60
    %v88 = vunpack.c.l.b16 %v61
    %v89 = vpack.c.b16 %v86, %v83
    %v90 = vpack.c.b16 %v87, %v84
    %v91 = vpack.c.b16 %v88, %v85
    %vm95 = vcmask 130048
    %v97 = vsel %vm95, %v57, 0
    %99 = vmatprep.subr.bf16.mxu0 %v90
    %100 = vmatpush1.bf16.msra.mxu0 %v89
    %101 = vmatprep.subr.bf16.mxu0 0
    %102 = vmatpush1.bf16.msra.mxu0 0
    %103 = vmatprep.subr.bf16.mxu0 0
    %104 = vmatpush1.bf16.msra.mxu0 0
    %105 = vmatprep.subr.bf16.mxu0 0
    %106 = vmatpush1.bf16.msra.mxu0 0
    %107 = vmatprep.subr.bf16.mxu0 0
    %108 = vmatpush1.bf16.msra.mxu0 0
    %109 = vmatprep.subr.bf16.mxu0 0
    %110 = vmatpush1.bf16.msra.mxu0 0
    %111 = vmatprep.subr.bf16.mxu0 0
    %112 = vmatpush1.bf16.msra.mxu0 0
    %113 = vmatprep.subr.bf16.mxu0 0
    %114 = vmatpush1.bf16.msra.mxu0 0
    %115 = vmatprep.subr.bf16.mxu0 0
    %116 = vmatpush1.bf16.msra.mxu0 0
    %117 = vmatprep.subr.bf16.mxu0 0
    %118 = vmatpush1.bf16.msra.mxu0 0
    %119 = vmatprep.subr.bf16.mxu0 0
    %120 = vmatpush1.bf16.msra.mxu0 0
    %121 = vmatprep.subr.bf16.mxu0 0
    %122 = vmatpush1.bf16.msra.mxu0 0
    %123 = vmatprep.subr.bf16.mxu0 0
    %124 = vmatpush1.bf16.msra.mxu0 0
    %125 = vmatprep.subr.bf16.mxu0 0
    %126 = vmatpush1.bf16.msra.mxu0 0
    %127 = vmatprep.subr.bf16.mxu0 0
    %128 = vmatpush1.bf16.msra.mxu0 0
    %129 = vmatprep.subr.bf16.mxu0 0
    %130 = vmatpush1.bf16.msra.mxu0 0
    %131 = vmatprep.mubr.bf16.mxu0 0
    %132 = vmatmul.mubr.bf16.gmra.mrb[0].mxu0 %v97
    %v133 = vpop.f32.mrb[0].mxu0
    %v134 = vadd.f32 %v67, %v133
    %v135 = vpop.f32.mrb[0].mxu0
    %v136 = vadd.f32 %v71, %v135
    %v137 = vpop.f32.mrb[0].mxu0
    %v138 = vpop.f32.mrb[0].mxu0
    %139 = vdwg.mxu0
    %140 = vmatprep.subr.bf16.mxu0 0
    %141 = vmatpush1.bf16.msra.mxu0 %v91
    %142 = vmatprep.subr.bf16.mxu0 0
    %143 = vmatpush1.bf16.msra.mxu0 0
    %144 = vmatprep.subr.bf16.mxu0 0
    %145 = vmatpush1.bf16.msra.mxu0 0
    %146 = vmatprep.subr.bf16.mxu0 0
    %147 = vmatpush1.bf16.msra.mxu0 0
    %148 = vmatprep.subr.bf16.mxu0 0
    %149 = vmatpush1.bf16.msra.mxu0 0
    %150 = vmatprep.subr.bf16.mxu0 0
    %151 = vmatpush1.bf16.msra.mxu0 0
    %152 = vmatprep.subr.bf16.mxu0 0
    %153 = vmatpush1.bf16.msra.mxu0 0
    %154 = vmatprep.subr.bf16.mxu0 0
    %155 = vmatpush1.bf16.msra.mxu0 0
    %156 = vmatprep.subr.bf16.mxu0 0
    %157 = vmatpush1.bf16.msra.mxu0 0
    %158 = vmatprep.subr.bf16.mxu0 0
    %159 = vmatpush1.bf16.msra.mxu0 0
    %160 = vmatprep.subr.bf16.mxu0 0
    %161 = vmatpush1.bf16.msra.mxu0 0
    %162 = vmatprep.subr.bf16.mxu0 0
    %163 = vmatpush1.bf16.msra.mxu0 0
    %164 = vmatprep.subr.bf16.mxu0 0
    %165 = vmatpush1.bf16.msra.mxu0 0
    %166 = vmatprep.subr.bf16.mxu0 0
    %167 = vmatpush1.bf16.msra.mxu0 0
    %168 = vmatprep.subr.bf16.mxu0 0
    %169 = vmatpush1.bf16.msra.mxu0 0
    %170 = vmatprep.subr.bf16.mxu0 0
    %171 = vmatpush1.bf16.msra.mxu0 0
    %172 = vmatprep.mubr.bf16.mxu0 0
    %173 = vmatmul.mubr.bf16.gmra.mrb[0].mxu0 %v97
    %v174 = vpop.f32.mrb[0].mxu0
    %v175 = vadd.f32 %v75, %v174
    %v176 = vpop.f32.mrb[0].mxu0
    %v177 = vpop.f32.mrb[0].mxu0
    %v178 = vpop.f32.mrb[0].mxu0
    %179 = vdwg.mxu0
    %v180 = vmul.f32 %v134, 0.5
    %v181 = vtanh.pop %v180
    %v182 = vmul.f32 %v181, 0.5
    %v183 = vadd.f32 %v182, 0.5
    %v184 = vtanh.pop %v136
    %v185 = vmul.f32 %v175, 0.5
    %v186 = vtanh.pop %v185
    %v187 = vmul.f32 %v186, 0.5
    %v188 = vadd.f32 %v187, 0.5
    %v189 = vmul.f32 %v183, %v184
    %v190 = vtanh.pop %v189
    %v191 = vmul.f32 %v188, %v190
    %v192 = vpack.c.bf16 %v191, %v191
    %v193 = vld [vmem:[#allocation5] sm:$0xff]
    %v194 = vld [vmem:[#allocation5 + $0x8] sm:$0xf]
    %v195 = vld [vmem:[#allocation5 + $0xc] sm:$0xff]
    %v196 = vld [vmem:[#allocation5 + $0x14] sm:$0xf]
    %v197 = vld [vmem:[#allocation5 + $0x18] sm:$0xff]
    %v198 = vld [vmem:[#allocation5 + $0x20] sm:$0xf]
    %v199 = vld [vmem:[#allocation5 + $0x24] sm:$0xff]
    %v200 = vld [vmem:[#allocation5 + $0x2c] sm:$0xf]
    %v201 = vld [vmem:[#allocation5 + $0x30] sm:$0xff]
    %v202 = vld [vmem:[#allocation5 + $0x38] sm:$0xf]
    %v203 = vld [vmem:[#allocation5 + $0x3c] sm:$0xff]
    %v204 = vld [vmem:[#allocation5 + $0x44] sm:$0xf]
    %v205 = vld [vmem:[#allocation5 + $0x48] sm:$0xff]
    %v206 = vld [vmem:[#allocation5 + $0x50] sm:$0xf]
    %v207 = vld [vmem:[#allocation5 + $0x54] sm:$0xff]
    %v208 = vld [vmem:[#allocation5 + $0x5c] sm:$0xf]
    %v209 = vld [vmem:[#allocation5 + $0x60] sm:$0xff]
    %v210 = vld [vmem:[#allocation5 + $0x68] sm:$0xf]
    %v211 = vld [vmem:[#allocation5 + $0x6c] sm:$0xff]
    %v212 = vld [vmem:[#allocation5 + $0x74] sm:$0xf]
    %v213 = vld [vmem:[#allocation5 + $0x78] sm:$0xff]
    %v214 = vld [vmem:[#allocation5 + $0x80] sm:$0xf]
    %v215 = vld [vmem:[#allocation5 + $0x84] sm:$0xff]
    %v216 = vld [vmem:[#allocation5 + $0x8c] sm:$0xf]
    %v217 = vld [vmem:[#allocation5 + $0x90] sm:$0xff]
    %v218 = vld [vmem:[#allocation5 + $0x98] sm:$0xf]
    %v219 = vld [vmem:[#allocation5 + $0x9c] sm:$0xff]
    %v220 = vld [vmem:[#allocation5 + $0xa4] sm:$0xf]
    %v221 = vld [vmem:[#allocation5 + $0xa8] sm:$0xff]
    %v222 = vld [vmem:[#allocation5 + $0xb0] sm:$0xf]
    %v223 = vld [vmem:[#allocation5 + $0xb4] sm:$0xff]
    %v224 = vld [vmem:[#allocation5 + $0xbc] sm:$0xf]
    %v225 = vld [vmem:[%s4] sm:$0x7]
    %v227 = vlaneseq
    %v228 = vshrl.u32 %v227, 7
    %v229 = vsub.s32 0, %v228
    %v230 = vrot.slane %v225, %v229
    %v231 = vlaneseq
    %v232 = vshrl.u32 %v231, 7
    %v233 = vsub.s32 1, %v232
    %v234 = vrot.slane %v225, %v233
    %v235 = vlaneseq
    %v236 = vshrl.u32 %v235, 7
    %v237 = vsub.s32 2, %v236
    %v238 = vrot.slane %v225, %v237
    %v274 = vunpack.c.l.b16 %v193
    %v275 = vunpack.c.h.b16 %v193
    %v276 = vunpack.c.l.b16 %v194
    %v277 = vunpack.c.l.b16 %v195
    %v278 = vunpack.c.h.b16 %v195
    %v279 = vunpack.c.l.b16 %v196
    %v280 = vunpack.c.l.b16 %v197
    %v281 = vunpack.c.h.b16 %v197
    %v282 = vunpack.c.l.b16 %v198
    %v283 = vunpack.c.l.b16 %v199
    %v284 = vunpack.c.h.b16 %v199
    %v285 = vunpack.c.l.b16 %v200
    %v286 = vunpack.c.l.b16 %v201
    %v287 = vunpack.c.h.b16 %v201
    %v288 = vunpack.c.l.b16 %v202
    %v289 = vunpack.c.l.b16 %v203
    %v290 = vunpack.c.h.b16 %v203
    %v291 = vunpack.c.l.b16 %v204
    %v292 = vunpack.c.l.b16 %v205
    %v293 = vunpack.c.h.b16 %v205
    %v294 = vunpack.c.l.b16 %v206
    %v295 = vunpack.c.l.b16 %v207
    %v296 = vunpack.c.h.b16 %v207
    %v297 = vunpack.c.l.b16 %v208
    %v298 = vunpack.c.l.b16 %v209
    %v299 = vunpack.c.h.b16 %v209
    %v300 = vunpack.c.l.b16 %v210
    %v301 = vunpack.c.l.b16 %v211
    %v302 = vunpack.c.h.b16 %v211
    %v303 = vunpack.c.l.b16 %v212
    %v304 = vunpack.c.l.b16 %v213
    %v305 = vunpack.c.h.b16 %v213
    %v306 = vunpack.c.l.b16 %v214
    %v307 = vunpack.c.l.b16 %v215
    %v308 = vunpack.c.h.b16 %v215
    %v309 = vunpack.c.l.b16 %v216
    %v310 = vunpack.c.l.b16 %v217
    %v311 = vunpack.c.h.b16 %v217
    %v312 = vunpack.c.l.b16 %v218
    %v313 = vunpack.c.l.b16 %v219
    %v314 = vunpack.c.h.b16 %v219
    %v315 = vunpack.c.l.b16 %v220
    %v316 = vunpack.c.l.b16 %v221
    %v317 = vunpack.c.h.b16 %v221
    %v318 = vunpack.c.l.b16 %v222
    %v319 = vunpack.c.l.b16 %v223
    %v320 = vunpack.c.h.b16 %v223
    %v321 = vunpack.c.l.b16 %v224
    %v322 = vpack.c.b16 %v277, %v274
    %v323 = vpack.c.b16 %v278, %v275
    %v324 = vpack.c.b16 %v279, %v276
    %v325 = vpack.c.b16 %v283, %v280
    %v326 = vpack.c.b16 %v284, %v281
    %v327 = vpack.c.b16 %v285, %v282
    %v328 = vpack.c.b16 %v289, %v286
    %v329 = vpack.c.b16 %v290, %v287
    %v330 = vpack.c.b16 %v291, %v288
    %v331 = vpack.c.b16 %v295, %v292
    %v332 = vpack.c.b16 %v296, %v293
    %v333 = vpack.c.b16 %v297, %v294
    %v334 = vpack.c.b16 %v301, %v298
    %v335 = vpack.c.b16 %v302, %v299
    %v336 = vpack.c.b16 %v303, %v300
    %v337 = vpack.c.b16 %v307, %v304
    %v338 = vpack.c.b16 %v308, %v305
    %v339 = vpack.c.b16 %v309, %v306
    %v340 = vpack.c.b16 %v313, %v310
    %v341 = vpack.c.b16 %v314, %v311
    %v342 = vpack.c.b16 %v315, %v312
    %v343 = vpack.c.b16 %v319, %v316
    %v344 = vpack.c.b16 %v320, %v317
    %v345 = vpack.c.b16 %v321, %v318
    %370 = vmatprep.subr.bf16.mxu0 %v323
    %371 = vmatpush1.bf16.msra.mxu0 %v322
    %372 = vmatprep.subr.bf16.mxu0 %v326
    %373 = vmatpush1.bf16.msra.mxu0 %v325
    %374 = vmatprep.subr.bf16.mxu0 %v329
    %375 = vmatpush1.bf16.msra.mxu0 %v328
    %376 = vmatprep.subr.bf16.mxu0 %v332
    %377 = vmatpush1.bf16.msra.mxu0 %v331
    %378 = vmatprep.subr.bf16.mxu0 %v335
    %379 = vmatpush1.bf16.msra.mxu0 %v334
    %380 = vmatprep.subr.bf16.mxu0 %v338
    %381 = vmatpush1.bf16.msra.mxu0 %v337
    %382 = vmatprep.subr.bf16.mxu0 %v341
    %383 = vmatpush1.bf16.msra.mxu0 %v340
    %384 = vmatprep.subr.bf16.mxu0 %v344
    %385 = vmatpush1.bf16.msra.mxu0 %v343
    %386 = vmatprep.subr.bf16.mxu0 0
    %387 = vmatpush1.bf16.msra.mxu0 0
    %388 = vmatprep.subr.bf16.mxu0 0
    %389 = vmatpush1.bf16.msra.mxu0 0
    %390 = vmatprep.subr.bf16.mxu0 0
    %391 = vmatpush1.bf16.msra.mxu0 0
    %392 = vmatprep.subr.bf16.mxu0 0
    %393 = vmatpush1.bf16.msra.mxu0 0
    %394 = vmatprep.subr.bf16.mxu0 0
    %395 = vmatpush1.bf16.msra.mxu0 0
    %396 = vmatprep.subr.bf16.mxu0 0
    %397 = vmatpush1.bf16.msra.mxu0 0
    %398 = vmatprep.subr.bf16.mxu0 0
    %399 = vmatpush1.bf16.msra.mxu0 0
    %400 = vmatprep.subr.bf16.mxu0 0
    %401 = vmatpush1.bf16.msra.mxu0 0
    %402 = vmatprep.mubr.bf16.mxu0 0
    %403 = vmatmul.mubr.bf16.gmra.mrb[0].mxu0 %v192
    %v404 = vpop.f32.mrb[0].mxu0
    %v405 = vadd.f32 %v230, %v404
    %v406 = vpop.f32.mrb[0].mxu0
    %v407 = vadd.f32 %v234, %v406
    %v408 = vpop.f32.mrb[0].mxu0
    %v409 = vpop.f32.mrb[0].mxu0
    %410 = vdwg.mxu0
    %411 = vmatprep.subr.bf16.mxu0 0
    %412 = vmatpush1.bf16.msra.mxu0 %v324
    %413 = vmatprep.subr.bf16.mxu0 0
    %414 = vmatpush1.bf16.msra.mxu0 %v327
    %415 = vmatprep.subr.bf16.mxu0 0
    %416 = vmatpush1.bf16.msra.mxu0 %v330
    %417 = vmatprep.subr.bf16.mxu0 0
    %418 = vmatpush1.bf16.msra.mxu0 %v333
    %419 = vmatprep.subr.bf16.mxu0 0
    %420 = vmatpush1.bf16.msra.mxu0 %v336
    %421 = vmatprep.subr.bf16.mxu0 0
    %422 = vmatpush1.bf16.msra.mxu0 %v339
    %423 = vmatprep.subr.bf16.mxu0 0
    %424 = vmatpush1.bf16.msra.mxu0 %v342
    %425 = vmatprep.subr.bf16.mxu0 0
    %426 = vmatpush1.bf16.msra.mxu0 %v345
    %427 = vmatprep.subr.bf16.mxu0 0
    %428 = vmatpush1.bf16.msra.mxu0 0
    %429 = vmatprep.subr.bf16.mxu0 0
    %430 = vmatpush1.bf16.msra.mxu0 0
    %431 = vmatprep.subr.bf16.mxu0 0
    %432 = vmatpush1.bf16.msra.mxu0 0
    %433 = vmatprep.subr.bf16.mxu0 0
    %434 = vmatpush1.bf16.msra.mxu0 0
    %435 = vmatprep.subr.bf16.mxu0 0
    %436 = vmatpush1.bf16.msra.mxu0 0
    %437 = vmatprep.subr.bf16.mxu0 0
    %438 = vmatpush1.bf16.msra.mxu0 0
    %439 = vmatprep.subr.bf16.mxu0 0
    %440 = vmatpush1.bf16.msra.mxu0 0
    %441 = vmatprep.subr.bf16.mxu0 0
    %442 = vmatpush1.bf16.msra.mxu0 0
    %443 = vmatprep.mubr.bf16.mxu0 0
    %444 = vmatmul.mubr.bf16.gmra.mrb[0].mxu0 %v192
    %v445 = vpop.f32.mrb[0].mxu0
    %v446 = vadd.f32 %v238, %v445
    %v447 = vpop.f32.mrb[0].mxu0
    %v448 = vpop.f32.mrb[0].mxu0
    %v449 = vpop.f32.mrb[0].mxu0
    %450 = vdwg.mxu0
    %v451 = vmul.f32 %v405, 0.5
    %v452 = vtanh.pop %v451
    %v453 = vmul.f32 %v452, 0.5
    %v454 = vadd.f32 %v453, 0.5
    %v455 = vtanh.pop %v407
    %v456 = vmul.f32 %v446, 0.5
    %v457 = vtanh.pop %v456
    %v458 = vmul.f32 %v457, 0.5
    %v459 = vadd.f32 %v458, 0.5
    %v460 = vmul.f32 %v454, %v455
    %v461 = vtanh.pop %v460
    %v462 = vmul.f32 %v459, %v461
    %v463 = vpack.c.bf16 %v462, %v462
    %v464 = vld [vmem:[%s5] sm:$0xf]
    %v465 = vld [vmem:[%s6] sm:$0xff]
    %467 = vset.pattern.permute.xlu0 0
    %468 = vperm.xlu0 %467, %v465
    %v469 = vpop.permute.xlu0 %468
    %471 = vmatprep.subr.bf16.mxu0 0
    %472 = vmatpush1.bf16.xpose.msra.mxu0 %v463
    %473 = vmatprep.subr.bf16.mxu0 0
    %474 = vmatpush1.bf16.xpose.msra.mxu0 0
    %475 = vmatprep.subr.bf16.mxu0 0
    %476 = vmatpush1.bf16.xpose.msra.mxu0 0
    %477 = vmatprep.subr.bf16.mxu0 0
    %478 = vmatpush1.bf16.xpose.msra.mxu0 0
    %479 = vmatprep.subr.bf16.mxu0 0
    %480 = vmatpush1.bf16.xpose.msra.mxu0 0
    %481 = vmatprep.subr.bf16.mxu0 0
    %482 = vmatpush1.bf16.xpose.msra.mxu0 0
    %483 = vmatprep.subr.bf16.mxu0 0
    %484 = vmatpush1.bf16.xpose.msra.mxu0 0
    %485 = vmatprep.subr.bf16.mxu0 0
    %486 = vmatpush1.bf16.xpose.msra.mxu0 0
    %487 = vmatprep.subr.bf16.mxu0 0
    %488 = vmatpush1.bf16.xpose.msra.mxu0 0
    %489 = vmatprep.subr.bf16.mxu0 0
    %490 = vmatpush1.bf16.xpose.msra.mxu0 0
    %491 = vmatprep.subr.bf16.mxu0 0
    %492 = vmatpush1.bf16.xpose.msra.mxu0 0
    %493 = vmatprep.subr.bf16.mxu0 0
    %494 = vmatpush1.bf16.xpose.msra.mxu0 0
    %495 = vmatprep.subr.bf16.mxu0 0
    %496 = vmatpush1.bf16.xpose.msra.mxu0 0
    %497 = vmatprep.subr.bf16.mxu0 0
    %498 = vmatpush1.bf16.xpose.msra.mxu0 0
    %499 = vmatprep.subr.bf16.mxu0 0
    %500 = vmatpush1.bf16.xpose.msra.mxu0 0
    %501 = vmatprep.subr.bf16.mxu0 0
    %502 = vmatpush1.bf16.xpose.msra.mxu0 0
    %503 = vmatprep.mubr.bf16.mxu0 0
    %504 = vmatmul.mubr.bf16.gmra.mrb[0].mxu0 %v464
    %v505 = vpop.f32.mrb[0].mxu0
    %v506 = vadd.f32 %v469, %v505
    %v507 = vpop.f32.mrb[0].mxu0
    %v508 = vpop.f32.mrb[0].mxu0
    %v509 = vpop.f32.mrb[0].mxu0
    %510 = vdwg.mxu0
    %vm511 = vcmask 64512
    %512 = vst.msk [vmem:[#allocation7] sm:$0xff] %vm511, %v506
    // Predicated region
    $region38: #{tpu_custom_call.1} parent=1 // pred_check
      _
    $region39: #{tpu_custom_call.1} parent=1 // pred_check_branch
      %514 = sbr.rel (0) target = $region41
    $region40: #{tpu_custom_call.1} parent=1 // pred_region
      %s516 = ssub.s32 128, 128
      %517 = vsyncadd [#allocation4], %s516
      %s519 = sshll.u32 [#allocation7], 4
      %s520 = int_to_ptr.vmem [resolvable:$true] %s519
      %522 = dma.vmem_to_hbm [thread:$0]  %s520, 128, %s7, [#allocation4]
    $region41: #{tpu_custom_call.1} parent=1 // pred_fallthru
      _
    // Predicated region
    $region42: #{tpu_custom_call.1} parent=1 // pred_check
      _
    $region43: #{tpu_custom_call.1} parent=1 // pred_check_branch
      %524 = sbr.rel (0) target = $region45
    $region44: #{tpu_custom_call.1} parent=1 // pred_region
      %525 = dma.done [#allocation4], 128
    $region45: #{tpu_custom_call.1} parent=1 // pred_fallthru
      _
    %526 = vsyncpa [#allocation3], 1
    %527 = vsyncpa [#allocation6], 1
    %528 = vsyncpa [#allocation4], 1

</llo_original>
